<compile_context>
chip_gen: v5e
topology: v5e:2x2
jax: 0.10.0
libtpu: 0.0.40
codegen_flags: <defaults>
</compile_context>

<pallas_src>
import functools

import jax
import jax.numpy as jnp
from jax.experimental import pallas as pl
from jax.experimental.pallas import tpu as pltpu


def _radiance_kernel(x_ref, v_ref, n_ref, f_ref,
                     w0_ref, b0_ref, w1_ref, b1_ref, w2_ref, b2_ref,
                     o_ref):
    """One batch tile of the radiance MLP. All operands live in VMEM.

    Layer 0: VMEM-resident concat of the four streamed tiles (f32, lane axis),
    one bf16 cast, then a single fused K=in_dim MXU dot against the unsplit W0.
    bf16 MXU operands, f32 accumulation / biases / sigmoid throughout.
    """
    bf16 = w0_ref.dtype

    # In-kernel concat replaces any HBM-side concatenate; a single fused dot
    # replaces the previous four split-K partial matmuls.
    h_in = jnp.concatenate(
        [x_ref[...], v_ref[...], n_ref[...], f_ref[...]], axis=-1)     # (BM, in_dim) f32
    h = jnp.dot(h_in.astype(bf16), w0_ref[...],
                preferred_element_type=jnp.float32) + b0_ref[...]
    h = jnp.maximum(h, 0.0)                                            # ReLU (f32)

    h = jnp.dot(h.astype(bf16), w1_ref[...],
                preferred_element_type=jnp.float32) + b1_ref[...]
    h = jnp.maximum(h, 0.0)                                            # ReLU (f32)

    out = jnp.dot(h.astype(bf16), w2_ref[...],
                  preferred_element_type=jnp.float32) + b2_ref[...]
    # TODO(synk): if profiling shows a vst.msk-heavy store epilogue (lane
    # width 3), emit the output lane-dense as (out_dim, B) instead.
    o_ref[...] = jax.nn.sigmoid(out).astype(o_ref.dtype)               # (BM, 3)


def _pick_bm(batch, block_b):
    """Batch tile size.

    One big tile whenever the batch fits (no forced 2-way split: v5e/v6e have
    a single TensorCore, so splitting only adds ~0.35 us/step overhead plus
    extra MXU weight pushes).  For large batches, the largest multiple-of-16
    tile <= block_b (sublane / bf16-packing alignment); the parallel grid axis
    then naturally shards across v7x's 2 TensorCores.
    """
    if batch <= block_b:
        return batch                       # equals full dim -> always legal
    return max(16, (block_b // 16) * 16)


def prepare_params(params):
    """One-time conversion: bf16 matmul weights, f32 (1, n) row-vector biases.

    Call this once and reuse across forward calls so repeated forwards do not
    re-run the convert ops (and their HBM round-trips) per call.
    """
    bf16 = jnp.bfloat16
    return {
        "w0": jnp.asarray(params["w0"], bf16),
        "w1": jnp.asarray(params["w1"], bf16),
        "w2": jnp.asarray(params["w2"], bf16),
        "b0": jnp.asarray(params["b0"], jnp.float32).reshape(1, -1),
        "b1": jnp.asarray(params["b1"], jnp.float32).reshape(1, -1),
        "b2": jnp.asarray(params["b2"], jnp.float32).reshape(1, -1),
    }


@functools.partial(jax.jit, static_argnames=("block_b",))
def radiance_net_forward(x, view_dirs, normals, geo_feat, params, *,
                         block_b=4096):
    """Pallas-backed forward of BaseRadianceNet (concrete RadianceNet MLP).

    Args:
        x:         (B, input_ch_pts)  float32
        view_dirs: (B, input_ch_view) float32
        normals:   (B, 3)             float32
        geo_feat:  (B, W_feat_in)     float32
        params:    dict with w0,b0,w1,b1,w2,b2 (weights stored (in, out));
                   ideally pre-converted with prepare_params().
    Returns:
        rgb: (B, 3) float32 in [0, 1]
    """
    B = x.shape[0]
    cx, cv, cn, cf = (x.shape[1], view_dirs.shape[1],
                      normals.shape[1], geo_feat.shape[1])
    in_dim = cx + cv + cn + cf
    W = params["w0"].shape[1]
    out_dim = params["w2"].shape[1]

    bf16 = jnp.bfloat16
    # No-ops when params were prepared with prepare_params() (dtype already
    # matches -> convert_element_type is elided under jit).
    w0 = jnp.asarray(params["w0"], bf16)
    w1 = jnp.asarray(params["w1"], bf16)
    w2 = jnp.asarray(params["w2"], bf16)
    b0 = jnp.asarray(params["b0"], jnp.float32).reshape(1, W)
    b1 = jnp.asarray(params["b1"], jnp.float32).reshape(1, W)
    b2 = jnp.asarray(params["b2"], jnp.float32).reshape(1, out_dim)

    bm = _pick_bm(B, block_b)
    grid = (pl.cdiv(B, bm),)
    # Note: when B % bm != 0, the last tile computes on Pallas-padded rows and
    # the padded output rows are masked on writeback — numerically harmless.

    tile = lambda c: pl.BlockSpec((bm, c), lambda i: (i, 0))            # streamed
    full = lambda a: pl.BlockSpec(a.shape, lambda i: (0,) * a.ndim)     # resident
    # TODO(synk): if the upstream producer can emit a pre-concatenated (B, 9)
    # or (B, in_dim) activation, stream it as a single BlockSpec to cut DMA
    # descriptor count and VMEM lane padding of the width-3 streams.
    # TODO(synk): only add pipeline_mode=pl.Buffered(3) on the streamed specs
    # if an xprof trace shows exposed DMA (unlikely: per-tile DMAs are tiny).

    flops = 2 * B * (in_dim * W + W * W + W * out_dim)
    bytes_accessed = (B * in_dim * 4                    # f32 activations in
                      + B * out_dim * 4                 # f32 rgb out
                      + (int(w0.size) + int(w1.size) + int(w2.size)) * 2
                      + (int(b0.size) + int(b1.size) + int(b2.size)) * 4)
    cost = pl.CostEstimate(flops=flops,
                           transcendentals=2 * B * out_dim,   # sigmoid: exp + recip
                           bytes_accessed=bytes_accessed)

    return pl.pallas_call(
        _radiance_kernel,
        out_shape=jax.ShapeDtypeStruct((B, out_dim), jnp.float32),
        grid_spec=pltpu.PrefetchScalarGridSpec(
            num_scalar_prefetch=0,
            grid=grid,
            in_specs=[
                tile(cx), tile(cv), tile(cn), tile(cf),    # streamed per tile
                full(w0), full(b0), full(w1), full(b1),    # resident weights
                full(w2), full(b2),
            ],
            out_specs=pl.BlockSpec((bm, out_dim), lambda i: (i, 0)),
        ),
        compiler_params=pltpu.CompilerParams(
            # TODO(synk): on v7x, verify via xprof that the parallel axis is
            # actually sharded across both TensorCores; if not, switch to an
            # explicit CORE_PARALLEL leading axis.
            dimension_semantics=("parallel",),
            # Raised for the larger batch tile; stays well under v7x's 64 MiB
            # physical VMEM (v5e/v6e have 128 MiB physical).
            vmem_limit_bytes=48 * 1024 * 1024,
        ),
        cost_estimate=cost,
    )(x, view_dirs, normals, geo_feat, w0, b0, w1, b1, w2, b2)


def init_params(key, in_dim, hidden, out_dim=3):
    """Deterministic synthetic parameter init (PyTorch-Linear-like scale)."""
    k0, k1, k2 = jax.random.split(key, 3)

    def lin(k, fan_in, fan_out):
        bound = 1.0 / jnp.sqrt(fan_in)
        kw, kb = jax.random.split(k)
        w = jax.random.uniform(kw, (fan_in, fan_out), jnp.float32, -bound, bound)
        b = jax.random.uniform(kb, (fan_out,), jnp.float32, -bound, bound)
        return w, b

    w0, b0 = lin(k0, in_dim, hidden)
    w1, b1 = lin(k1, hidden, hidden)
    w2, b2 = lin(k2, hidden, out_dim)
    return {"w0": w0, "b0": b0, "w1": w1, "b1": b1, "w2": w2, "b2": b2}


def _reference_forward(x, view_dirs, normals, geo_feat, params):
    """Pure-JAX f32 reference for correctness check."""
    h = jnp.concatenate([x, view_dirs, normals, geo_feat], axis=-1)
    h = jnp.maximum(h @ params["w0"] + params["b0"], 0.0)
    h = jnp.maximum(h @ params["w1"] + params["b1"], 0.0)
    return jax.nn.sigmoid(h @ params["w2"] + params["b2"])


if __name__ == "__main__":
    key = jax.random.PRNGKey(0)
    kx, kv, kn, kf, kp = jax.random.split(key, 5)

    B = 64                  # small demo batch of rays/points
    input_ch_pts = 3        # xyz
    input_ch_view = 3       # view direction
    W_feat_in = 32          # geometry feature width
    hidden = 64             # MLP hidden width

    x = jax.random.normal(kx, (B, input_ch_pts), jnp.float32)
    view_dirs = jax.random.normal(kv, (B, input_ch_view), jnp.float32)
    normals = jax.random.normal(kn, (B, 3), jnp.float32)
    geo_feat = jax.random.normal(kf, (B, W_feat_in), jnp.float32)

    in_dim = input_ch_pts + input_ch_view + 3 + W_feat_in
    params_f32 = init_params(kp, in_dim, hidden, out_dim=3)
    # One-time bf16 weight conversion, reused across all forward calls.
    params = prepare_params(params_f32)

    rgb = radiance_net_forward(x, view_dirs, normals, geo_feat, params)
    rgb = jax.block_until_ready(rgb)

    ref = _reference_forward(x, view_dirs, normals, geo_feat, params_f32)
    assert rgb.shape == (B, 3)
    # bf16 MXU operands / f32 accumulation: loosened tolerance vs f32 reference.
    assert jnp.allclose(rgb, ref, atol=3e-2), "mismatch vs reference"

    print("KERNEL_OK")
</pallas_src>

<mosaic_0001>
module attributes {stable_mosaic.version = 11 : i64} {
  func.func @_radiance_kernel(%arg0: i32, %arg1: memref<64x3xf32, #tpu.memory_space<vmem>>, %arg2: memref<64x3xf32, #tpu.memory_space<vmem>>, %arg3: memref<64x3xf32, #tpu.memory_space<vmem>>, %arg4: memref<64x32xf32, #tpu.memory_space<vmem>>, %arg5: memref<41x64xbf16, #tpu.memory_space<vmem>>, %arg6: memref<1x64xf32, #tpu.memory_space<vmem>>, %arg7: memref<64x64xbf16, #tpu.memory_space<vmem>>, %arg8: memref<1x64xf32, #tpu.memory_space<vmem>>, %arg9: memref<64x3xbf16, #tpu.memory_space<vmem>>, %arg10: memref<1x3xf32, #tpu.memory_space<vmem>>, %arg11: memref<64x3xf32, #tpu.memory_space<vmem>>) attributes {dimension_semantics = [#tpu.dimension_semantics<parallel>], iteration_bounds = array<i64: 1>, scalar_prefetch = 0 : i64, scratch_operands = 0 : i64, tpu.core_type = #tpu.core_type<tc>, window_params = [{transform_indices = @transform_0, window_bounds = array<i64: 64, 3>}, {transform_indices = @transform_1, window_bounds = array<i64: 64, 3>}, {transform_indices = @transform_2, window_bounds = array<i64: 64, 3>}, {transform_indices = @transform_3, window_bounds = array<i64: 64, 32>}, {pipeline_mode = #tpu.pipeline_mode<synchronous>, transform_indices = @transform_4, window_bounds = array<i64: 41, 64>}, {pipeline_mode = #tpu.pipeline_mode<synchronous>, transform_indices = @transform_5, window_bounds = array<i64: 1, 64>}, {pipeline_mode = #tpu.pipeline_mode<synchronous>, transform_indices = @transform_6, window_bounds = array<i64: 64, 64>}, {pipeline_mode = #tpu.pipeline_mode<synchronous>, transform_indices = @transform_7, window_bounds = array<i64: 1, 64>}, {pipeline_mode = #tpu.pipeline_mode<synchronous>, transform_indices = @transform_8, window_bounds = array<i64: 64, 3>}, {pipeline_mode = #tpu.pipeline_mode<synchronous>, transform_indices = @transform_9, window_bounds = array<i64: 1, 3>}, {transform_indices = @transform_10, window_bounds = array<i64: 64, 3>}]} {
    %c0 = arith.constant 0 : index
    %c0_0 = arith.constant 0 : index
    %0 = vector.load %arg1[%c0, %c0_0] : memref<64x3xf32, #tpu.memory_space<vmem>>, vector<64x3xf32>
    %c0_1 = arith.constant 0 : index
    %c0_2 = arith.constant 0 : index
    %1 = vector.load %arg2[%c0_1, %c0_2] : memref<64x3xf32, #tpu.memory_space<vmem>>, vector<64x3xf32>
    %c0_3 = arith.constant 0 : index
    %c0_4 = arith.constant 0 : index
    %2 = vector.load %arg3[%c0_3, %c0_4] : memref<64x3xf32, #tpu.memory_space<vmem>>, vector<64x3xf32>
    %c0_5 = arith.constant 0 : index
    %c0_6 = arith.constant 0 : index
    %3 = vector.load %arg4[%c0_5, %c0_6] : memref<64x32xf32, #tpu.memory_space<vmem>>, vector<64x32xf32>
    %4 = tpu.concatenate %0, %1, %2, %3 in 1 : vector<64x3xf32>, vector<64x3xf32>, vector<64x3xf32>, vector<64x32xf32> -> vector<64x41xf32>
    %5 = arith.truncf %4 : vector<64x41xf32> to vector<64x41xbf16>
    %c0_7 = arith.constant 0 : index
    %c0_8 = arith.constant 0 : index
    %6 = vector.load %arg5[%c0_7, %c0_8] : memref<41x64xbf16, #tpu.memory_space<vmem>>, vector<41x64xbf16>
    %cst = arith.constant dense<0.000000e+00> : vector<64x64xf32>
    %7 = tpu.matmul %5, %6, %cst {dimension_numbers = #tpu.dot_dimension_numbers<[1], [0], [0], [1], [0, 0, 1, 1], [], []>} : vector<64x41xbf16>, vector<41x64xbf16>, vector<64x64xf32> -> vector<64x64xf32>
    %c0_9 = arith.constant 0 : index
    %c0_10 = arith.constant 0 : index
    %8 = vector.load %arg6[%c0_9, %c0_10] : memref<1x64xf32, #tpu.memory_space<vmem>>, vector<1x64xf32>
    %9 = vector.broadcast %8 : vector<1x64xf32> to vector<64x64xf32>
    %10 = arith.addf %7, %9 : vector<64x64xf32>
    %cst_11 = arith.constant 0.000000e+00 : f32
    %11 = vector.broadcast %cst_11 : f32 to vector<64x64xf32>
    %12 = arith.maximumf %10, %11 : vector<64x64xf32>
    %13 = arith.truncf %12 : vector<64x64xf32> to vector<64x64xbf16>
    %c0_12 = arith.constant 0 : index
    %c0_13 = arith.constant 0 : index
    %14 = vector.load %arg7[%c0_12, %c0_13] : memref<64x64xbf16, #tpu.memory_space<vmem>>, vector<64x64xbf16>
    %cst_14 = arith.constant dense<0.000000e+00> : vector<64x64xf32>
    %15 = tpu.matmul %13, %14, %cst_14 {dimension_numbers = #tpu.dot_dimension_numbers<[1], [0], [0], [1], [0, 0, 1, 1], [], []>} : vector<64x64xbf16>, vector<64x64xbf16>, vector<64x64xf32> -> vector<64x64xf32>
    %c0_15 = arith.constant 0 : index
    %c0_16 = arith.constant 0 : index
    %16 = vector.load %arg8[%c0_15, %c0_16] : memref<1x64xf32, #tpu.memory_space<vmem>>, vector<1x64xf32>
    %17 = vector.broadcast %16 : vector<1x64xf32> to vector<64x64xf32>
    %18 = arith.addf %15, %17 : vector<64x64xf32>
    %cst_17 = arith.constant 0.000000e+00 : f32
    %19 = vector.broadcast %cst_17 : f32 to vector<64x64xf32>
    %20 = arith.maximumf %18, %19 : vector<64x64xf32>
    %21 = arith.truncf %20 : vector<64x64xf32> to vector<64x64xbf16>
    %c0_18 = arith.constant 0 : index
    %c0_19 = arith.constant 0 : index
    %22 = vector.load %arg9[%c0_18, %c0_19] : memref<64x3xbf16, #tpu.memory_space<vmem>>, vector<64x3xbf16>
    %cst_20 = arith.constant dense<0.000000e+00> : vector<64x3xf32>
    %23 = tpu.matmul %21, %22, %cst_20 {dimension_numbers = #tpu.dot_dimension_numbers<[1], [0], [0], [1], [0, 0, 1, 1], [], []>} : vector<64x64xbf16>, vector<64x3xbf16>, vector<64x3xf32> -> vector<64x3xf32>
    %c0_21 = arith.constant 0 : index
    %c0_22 = arith.constant 0 : index
    %24 = vector.load %arg10[%c0_21, %c0_22] : memref<1x3xf32, #tpu.memory_space<vmem>>, vector<1x3xf32>
    %25 = vector.broadcast %24 : vector<1x3xf32> to vector<64x3xf32>
    %26 = arith.addf %23, %25 : vector<64x3xf32>
    %27 = arith.negf %26 : vector<64x3xf32>
    %28 = math.exp %27 : vector<64x3xf32>
    %cst_23 = arith.constant 1.000000e+00 : f32
    %29 = vector.broadcast %cst_23 : f32 to vector<64x3xf32>
    %30 = arith.addf %29, %28 : vector<64x3xf32>
    %31 = arith.divf %29, %30 : vector<64x3xf32>
    %c0_24 = arith.constant 0 : index
    %c0_25 = arith.constant 0 : index
    %32 = vector.load %arg11[%c0_24, %c0_25] : memref<64x3xf32, #tpu.memory_space<vmem>>, vector<64x3xf32>
    tpu.vector_store %arg11[%c0_24, %c0_25], %31 {strides = array<i32>} : memref<64x3xf32, #tpu.memory_space<vmem>>, vector<64x3xf32>,
    return
  }
  func.func @transform_0(%arg0: i32) -> (i32, i32) {
    %c0_i32 = arith.constant 0 : i32
    %c0_i32_0 = arith.constant 0 : i32
    return %arg0, %c0_i32 : i32, i32
  }
  func.func @transform_1(%arg0: i32) -> (i32, i32) {
    %c0_i32 = arith.constant 0 : i32
    %c0_i32_0 = arith.constant 0 : i32
    return %arg0, %c0_i32 : i32, i32
  }
  func.func @transform_2(%arg0: i32) -> (i32, i32) {
    %c0_i32 = arith.constant 0 : i32
    %c0_i32_0 = arith.constant 0 : i32
    return %arg0, %c0_i32 : i32, i32
  }
  func.func @transform_3(%arg0: i32) -> (i32, i32) {
    %c0_i32 = arith.constant 0 : i32
    %c0_i32_0 = arith.constant 0 : i32
    return %arg0, %c0_i32 : i32, i32
  }
  func.func @transform_4(%arg0: i32) -> (i32, i32) {
    %c0_i32 = arith.constant 0 : i32
    %c0_i32_0 = arith.constant 0 : i32
    %c0_i32_1 = arith.constant 0 : i32
    return %c0_i32, %c0_i32_0 : i32, i32
  }
  func.func @transform_5(%arg0: i32) -> (i32, i32) {
    %c0_i32 = arith.constant 0 : i32
    %c0_i32_0 = arith.constant 0 : i32
    %c0_i32_1 = arith.constant 0 : i32
    return %c0_i32, %c0_i32_0 : i32, i32
  }
  func.func @transform_6(%arg0: i32) -> (i32, i32) {
    %c0_i32 = arith.constant 0 : i32
    %c0_i32_0 = arith.constant 0 : i32
    %c0_i32_1 = arith.constant 0 : i32
    return %c0_i32, %c0_i32_0 : i32, i32
  }
  func.func @transform_7(%arg0: i32) -> (i32, i32) {
    %c0_i32 = arith.constant 0 : i32
    %c0_i32_0 = arith.constant 0 : i32
    %c0_i32_1 = arith.constant 0 : i32
    return %c0_i32, %c0_i32_0 : i32, i32
  }
  func.func @transform_8(%arg0: i32) -> (i32, i32) {
    %c0_i32 = arith.constant 0 : i32
    %c0_i32_0 = arith.constant 0 : i32
    %c0_i32_1 = arith.constant 0 : i32
    return %c0_i32, %c0_i32_0 : i32, i32
  }
  func.func @transform_9(%arg0: i32) -> (i32, i32) {
    %c0_i32 = arith.constant 0 : i32
    %c0_i32_0 = arith.constant 0 : i32
    %c0_i32_1 = arith.constant 0 : i32
    return %c0_i32, %c0_i32_0 : i32, i32
  }
  func.func @transform_10(%arg0: i32) -> (i32, i32) {
    %c0_i32 = arith.constant 0 : i32
    %c0_i32_0 = arith.constant 0 : i32
    return %arg0, %c0_i32 : i32, i32
  }
}

</mosaic_0001>

<llo_original>
// kernel: radiance_net_forward.1
$region0: #{radiance_net_forward.1}
  #allocation0 [shape = 'u32[]', space=smem, size = 0x4, offset = 0x4, fixed_abs, tag = 'smem constant byte address 0x4 - core index']
  #allocation1 [shape = 'u32[72,128]{1,0:T(1,128)}', space=vmem, size = 0x9000, scoped, tag = 'internal scratch']
  %s0 = inlined_call_operand.vmem [shape: f32[64,3], index: 0, kind: input, shape index: {}]
  %s1 = inlined_call_operand.vmem [shape: f32[64,3], index: 1, kind: input, shape index: {}]
  %s2 = inlined_call_operand.vmem [shape: f32[64,3], index: 2, kind: input, shape index: {}]
  %s3 = inlined_call_operand.vmem [shape: f32[64,32], index: 3, kind: input, shape index: {}]
  %s4 = inlined_call_operand.vmem [shape: bf16[41,64], index: 4, kind: input, shape index: {}]
  %s5 = inlined_call_operand.vmem [shape: f32[1,64], index: 5, kind: input, shape index: {}]
  %s6 = inlined_call_operand.vmem [shape: bf16[64,64], index: 6, kind: input, shape index: {}]
  %s7 = inlined_call_operand.vmem [shape: f32[1,64], index: 7, kind: input, shape index: {}]
  %s8 = inlined_call_operand.vmem [shape: bf16[64,3], index: 8, kind: input, shape index: {}]
  %s9 = inlined_call_operand.vmem [shape: f32[1,3], index: 9, kind: input, shape index: {}]
  %s10 = inlined_call_operand.vmem [shape: f32[64,3], index: 10, kind: output, shape index: {}]
  %s11 = sld [smem:[#allocation0]]
  $region50: #{radiance_net_forward.1} parent=0
    _
  %s13 = ssub.s32 1, %s11
  %s14 = scalar_select 0, %s13, %s11
  // Predicated region
  $region2: #{radiance_net_forward.1} parent=0 // pred_check
    _
  $region3: #{radiance_net_forward.1} parent=0 // pred_check_branch
    %16 = sbr.rel (0) target = $region5
  $region4: #{radiance_net_forward.1} parent=0 // pred_region
    _
  $region5: #{radiance_net_forward.1} parent=0 // pred_fallthru
    _
  // Predicated region
  $region6: #{radiance_net_forward.1} parent=0 // pred_check
    _
  $region7: #{radiance_net_forward.1} parent=0 // pred_check_branch
    %18 = sbr.rel (0) target = $region9
  $region8: #{radiance_net_forward.1} parent=0 // pred_region
    _
  $region9: #{radiance_net_forward.1} parent=0 // pred_fallthru
    _
  // Predicated region
  $region10: #{radiance_net_forward.1} parent=0 // pred_check
    _
  $region11: #{radiance_net_forward.1} parent=0 // pred_check_branch
    %20 = sbr.rel (0) target = $region13
  $region12: #{radiance_net_forward.1} parent=0 // pred_region
    _
  $region13: #{radiance_net_forward.1} parent=0 // pred_fallthru
    _
  // Predicated region
  $region14: #{radiance_net_forward.1} parent=0 // pred_check
    _
  $region15: #{radiance_net_forward.1} parent=0 // pred_check_branch
    %22 = sbr.rel (0) target = $region17
  $region16: #{radiance_net_forward.1} parent=0 // pred_region
    _
  $region17: #{radiance_net_forward.1} parent=0 // pred_fallthru
    _
  // Predicated region
  $region18: #{radiance_net_forward.1} parent=0 // pred_check
    _
  $region19: #{radiance_net_forward.1} parent=0 // pred_check_branch
    %24 = sbr.rel (0) target = $region21
  $region20: #{radiance_net_forward.1} parent=0 // pred_region
    _
  $region21: #{radiance_net_forward.1} parent=0 // pred_fallthru
    _
  // Predicated region
  $region22: #{radiance_net_forward.1} parent=0 // pred_check
    _
  $region23: #{radiance_net_forward.1} parent=0 // pred_check_branch
    %26 = sbr.rel (0) target = $region25
  $region24: #{radiance_net_forward.1} parent=0 // pred_region
    _
  $region25: #{radiance_net_forward.1} parent=0 // pred_fallthru
    _
  // Predicated region
  $region26: #{radiance_net_forward.1} parent=0 // pred_check
    _
  $region27: #{radiance_net_forward.1} parent=0 // pred_check_branch
    %28 = sbr.rel (0) target = $region29
  $region28: #{radiance_net_forward.1} parent=0 // pred_region
    _
  $region29: #{radiance_net_forward.1} parent=0 // pred_fallthru
    _
  // Predicated region
  $region30: #{radiance_net_forward.1} parent=0 // pred_check
    _
  $region31: #{radiance_net_forward.1} parent=0 // pred_check_branch
    %30 = sbr.rel (0) target = $region33
  $region32: #{radiance_net_forward.1} parent=0 // pred_region
    _
  $region33: #{radiance_net_forward.1} parent=0 // pred_fallthru
    _
  // Predicated region
  $region34: #{radiance_net_forward.1} parent=0 // pred_check
    _
  $region35: #{radiance_net_forward.1} parent=0 // pred_check_branch
    %32 = sbr.rel (0) target = $region37
  $region36: #{radiance_net_forward.1} parent=0 // pred_region
    _
  $region37: #{radiance_net_forward.1} parent=0 // pred_fallthru
    _
  // Predicated region
  $region38: #{radiance_net_forward.1} parent=0 // pred_check
    _
  $region39: #{radiance_net_forward.1} parent=0 // pred_check_branch
    %34 = sbr.rel (0) target = $region41
  $region40: #{radiance_net_forward.1} parent=0 // pred_region
    _
  $region41: #{radiance_net_forward.1} parent=0 // pred_fallthru
    _
  %v36 = vld [vmem:[%s0] sm:$0xff]
  %v37 = vld [vmem:[%s0 + $0x8] sm:$0xff]
  %v38 = vld [vmem:[%s0 + $0x10] sm:$0xff]
  %v39 = vld [vmem:[%s0 + $0x18] sm:$0xff]
  %v40 = vld [vmem:[%s0 + $0x20] sm:$0xff]
  %v41 = vld [vmem:[%s0 + $0x28] sm:$0xff]
  %v42 = vld [vmem:[%s0 + $0x30] sm:$0xff]
  %v43 = vld [vmem:[%s0 + $0x38] sm:$0xff]
  %v44 = vld [vmem:[%s1] sm:$0xff]
  %v45 = vld [vmem:[%s1 + $0x8] sm:$0xff]
  %v46 = vld [vmem:[%s1 + $0x10] sm:$0xff]
  %v47 = vld [vmem:[%s1 + $0x18] sm:$0xff]
  %v48 = vld [vmem:[%s1 + $0x20] sm:$0xff]
  %v49 = vld [vmem:[%s1 + $0x28] sm:$0xff]
  %v50 = vld [vmem:[%s1 + $0x30] sm:$0xff]
  %v51 = vld [vmem:[%s1 + $0x38] sm:$0xff]
  %v52 = vld [vmem:[%s2] sm:$0xff]
  %v53 = vld [vmem:[%s2 + $0x8] sm:$0xff]
  %v54 = vld [vmem:[%s2 + $0x10] sm:$0xff]
  %v55 = vld [vmem:[%s2 + $0x18] sm:$0xff]
  %v56 = vld [vmem:[%s2 + $0x20] sm:$0xff]
  %v57 = vld [vmem:[%s2 + $0x28] sm:$0xff]
  %v58 = vld [vmem:[%s2 + $0x30] sm:$0xff]
  %v59 = vld [vmem:[%s2 + $0x38] sm:$0xff]
  %v60 = vld [vmem:[%s3] sm:$0xff]
  %v61 = vld [vmem:[%s3 + $0x8] sm:$0xff]
  %v62 = vld [vmem:[%s3 + $0x10] sm:$0xff]
  %v63 = vld [vmem:[%s3 + $0x18] sm:$0xff]
  %v64 = vld [vmem:[%s3 + $0x20] sm:$0xff]
  %v65 = vld [vmem:[%s3 + $0x28] sm:$0xff]
  %v66 = vld [vmem:[%s3 + $0x30] sm:$0xff]
  %v67 = vld [vmem:[%s3 + $0x38] sm:$0xff]
  %76 = vrot.lane.b32.xlu0 %v44, 3
  %v77 = vpop.permute.xlu0 %76
  %78 = vrot.lane.b32.xlu0 %v45, 3
  %v79 = vpop.permute.xlu0 %78
  %80 = vrot.lane.b32.xlu0 %v46, 3
  %v81 = vpop.permute.xlu0 %80
  %82 = vrot.lane.b32.xlu0 %v47, 3
  %v83 = vpop.permute.xlu0 %82
  %84 = vrot.lane.b32.xlu0 %v48, 3
  %v85 = vpop.permute.xlu0 %84
  %86 = vrot.lane.b32.xlu0 %v49, 3
  %v87 = vpop.permute.xlu0 %86
  %88 = vrot.lane.b32.xlu0 %v50, 3
  %v89 = vpop.permute.xlu0 %88
  %90 = vrot.lane.b32.xlu0 %v51, 3
  %v91 = vpop.permute.xlu0 %90
  %108 = vrot.lane.b32.xlu0 %v52, 6
  %v109 = vpop.permute.xlu0 %108
  %110 = vrot.lane.b32.xlu0 %v53, 6
  %v111 = vpop.permute.xlu0 %110
  %112 = vrot.lane.b32.xlu0 %v54, 6
  %v113 = vpop.permute.xlu0 %112
  %114 = vrot.lane.b32.xlu0 %v55, 6
  %v115 = vpop.permute.xlu0 %114
  %116 = vrot.lane.b32.xlu0 %v56, 6
  %v117 = vpop.permute.xlu0 %116
  %118 = vrot.lane.b32.xlu0 %v57, 6
  %v119 = vpop.permute.xlu0 %118
  %120 = vrot.lane.b32.xlu0 %v58, 6
  %v121 = vpop.permute.xlu0 %120
  %122 = vrot.lane.b32.xlu0 %v59, 6
  %v123 = vpop.permute.xlu0 %122
  %140 = vrot.lane.b32.xlu0 %v60, 9
  %v141 = vpop.permute.xlu0 %140
  %142 = vrot.lane.b32.xlu0 %v61, 9
  %v143 = vpop.permute.xlu0 %142
  %144 = vrot.lane.b32.xlu0 %v62, 9
  %v145 = vpop.permute.xlu0 %144
  %146 = vrot.lane.b32.xlu0 %v63, 9
  %v147 = vpop.permute.xlu0 %146
  %148 = vrot.lane.b32.xlu0 %v64, 9
  %v149 = vpop.permute.xlu0 %148
  %150 = vrot.lane.b32.xlu0 %v65, 9
  %v151 = vpop.permute.xlu0 %150
  %152 = vrot.lane.b32.xlu0 %v66, 9
  %v153 = vpop.permute.xlu0 %152
  %154 = vrot.lane.b32.xlu0 %v67, 9
  %v155 = vpop.permute.xlu0 %154
  %vm164 = vcmask 23552
  %v165 = vsel %vm164, %v36, %v77
  %v166 = vsel %vm164, %v37, %v79
  %v167 = vsel %vm164, %v38, %v81
  %v168 = vsel %vm164, %v39, %v83
  %v169 = vsel %vm164, %v40, %v85
  %v170 = vsel %vm164, %v41, %v87
  %v171 = vsel %vm164, %v42, %v89
  %v172 = vsel %vm164, %v43, %v91
  %vm173 = vcmask 48128
  %v174 = vsel %vm173, %v165, %v109
  %v175 = vsel %vm173, %v166, %v111
  %v176 = vsel %vm173, %v167, %v113
  %v177 = vsel %vm173, %v168, %v115
  %v178 = vsel %vm173, %v169, %v117
  %v179 = vsel %vm173, %v170, %v119
  %v180 = vsel %vm173, %v171, %v121
  %v181 = vsel %vm173, %v172, %v123
  %vm182 = vcmask 72704
  %v183 = vsel %vm182, %v174, %v141
  %v184 = vsel %vm182, %v175, %v143
  %v185 = vsel %vm182, %v176, %v145
  %v186 = vsel %vm182, %v177, %v147
  %v187 = vsel %vm182, %v178, %v149
  %v188 = vsel %vm182, %v179, %v151
  %v189 = vsel %vm182, %v180, %v153
  %v190 = vsel %vm182, %v181, %v155
  %v191 = vpack.c.bf16 %v184, %v183
  %v192 = vpack.c.bf16 %v186, %v185
  %v193 = vpack.c.bf16 %v188, %v187
  %v194 = vpack.c.bf16 %v190, %v189
  %v195 = vld [vmem:[%s4] sm:$0xf]
  %v196 = vld [vmem:[%s4 + $0x4] sm:$0xf]
  %v197 = vld [vmem:[%s4 + $0x8] sm:$0xf]
  %v198 = vld [vmem:[%s4 + $0xc] sm:$0xf]
  %v199 = vld [vmem:[%s4 + $0x10] sm:$0xf]
  %v200 = vld [vmem:[%s4 + $0x14] sm:$0x1]
  %v201 = vld [vmem:[%s5] sm:$0x1]
  %v203 = vperm.slane %v201, 0
  %v211 = vunpack.c.l.b16 %v195
  %v212 = vunpack.c.l.b16 %v196
  %v213 = vunpack.c.l.b16 %v197
  %v214 = vunpack.c.l.b16 %v198
  %v215 = vunpack.c.l.b16 %v199
  %v216 = vunpack.c.l.b16 %v200
  %v217 = vpack.c.b16 %v212, %v211
  %v218 = vpack.c.b16 %v214, %v213
  %v219 = vpack.c.b16 %v216, %v215
  %vm222 = vcmask 334848
  %v224 = vsel %vm222, %v191, 0
  %v227 = vsel %vm222, %v192, 0
  %v230 = vsel %vm222, %v193, 0
  %v233 = vsel %vm222, %v194, 0
  %vm235 = vcmask 1043456
  %vm236 = vcmask 1044480
  %v237 = vsel %vm235, 4294967295, 65535
  %v238 = vsel %vm236, %v237, 0
  %v240 = vand.u32 %v219, %v238
  %242 = vmatpush.bf16.msra.mxu0 0
  %243 = vmatpush.bf16.msra.mxu0 0
  %244 = vmatpush.bf16.msra.mxu0 0
  %245 = vmatpush.bf16.msra.mxu0 0
  %246 = vmatpush.bf16.msra.mxu0 0
  %247 = vmatpush.bf16.msra.mxu0 %v240
  %248 = vmatpush.bf16.msra.mxu0 %v218
  %249 = vmatpush.bf16.msra.mxu0 %v217
  %250 = vmatmul.bf16.gmra.mxu0 %v224
  %v251 = vpop.f32.mrf.mxu0
  %v252 = vadd.f32 %v203, %v251
  %v253 = vpop.f32.mrf.mxu0
  %v254 = vadd.f32 %v203, %v253
  %255 = vmatmul.bf16.gmra.mxu0 %v227
  %v256 = vpop.f32.mrf.mxu0
  %v257 = vadd.f32 %v203, %v256
  %v258 = vpop.f32.mrf.mxu0
  %v259 = vadd.f32 %v203, %v258
  %260 = vmatmul.bf16.gmra.mxu0 %v230
  %v261 = vpop.f32.mrf.mxu0
  %v262 = vadd.f32 %v203, %v261
  %v263 = vpop.f32.mrf.mxu0
  %v264 = vadd.f32 %v203, %v263
  %265 = vmatmul.bf16.gmra.mxu0 %v233
  %v266 = vpop.f32.mrf.mxu0
  %v267 = vadd.f32 %v203, %v266
  %v268 = vpop.f32.mrf.mxu0
  %v269 = vadd.f32 %v203, %v268
  %270 = vdwg.mxu0
  %v271 = vmax.f32 %v252, 0.0
  %v272 = vmax.f32 %v254, 0.0
  %v273 = vmax.f32 %v257, 0.0
  %v274 = vmax.f32 %v259, 0.0
  %v275 = vmax.f32 %v262, 0.0
  %v276 = vmax.f32 %v264, 0.0
  %v277 = vmax.f32 %v267, 0.0
  %v278 = vmax.f32 %v269, 0.0
  %v279 = vpack.c.bf16 %v272, %v271
  %v280 = vpack.c.bf16 %v274, %v273
  %v281 = vpack.c.bf16 %v276, %v275
  %v282 = vpack.c.bf16 %v278, %v277
  %v283 = vld [vmem:[%s6] sm:$0xf]
  %v284 = vld [vmem:[%s6 + $0x4] sm:$0xf]
  %v285 = vld [vmem:[%s6 + $0x8] sm:$0xf]
  %v286 = vld [vmem:[%s6 + $0xc] sm:$0xf]
  %v287 = vld [vmem:[%s6 + $0x10] sm:$0xf]
  %v288 = vld [vmem:[%s6 + $0x14] sm:$0xf]
  %v289 = vld [vmem:[%s6 + $0x18] sm:$0xf]
  %v290 = vld [vmem:[%s6 + $0x1c] sm:$0xf]
  %v291 = vld [vmem:[%s7] sm:$0x1]
  %v293 = vperm.slane %v291, 0
  %v303 = vunpack.c.l.b16 %v283
  %v304 = vunpack.c.l.b16 %v284
  %v305 = vunpack.c.l.b16 %v285
  %v306 = vunpack.c.l.b16 %v286
  %v307 = vunpack.c.l.b16 %v287
  %v308 = vunpack.c.l.b16 %v288
  %v309 = vunpack.c.l.b16 %v289
  %v310 = vunpack.c.l.b16 %v290
  %v311 = vpack.c.b16 %v304, %v303
  %v312 = vpack.c.b16 %v306, %v305
  %v313 = vpack.c.b16 %v308, %v307
  %v314 = vpack.c.b16 %v310, %v309
  %vm319 = vcmask 523264
  %v321 = vsel %vm319, %v279, 0
  %v324 = vsel %vm319, %v280, 0
  %v327 = vsel %vm319, %v281, 0
  %v330 = vsel %vm319, %v282, 0
  %332 = vmatpush.bf16.msra.mxu0 0
  %333 = vmatpush.bf16.msra.mxu0 0
  %334 = vmatpush.bf16.msra.mxu0 0
  %335 = vmatpush.bf16.msra.mxu0 0
  %336 = vmatpush.bf16.msra.mxu0 %v314
  %337 = vmatpush.bf16.msra.mxu0 %v313
  %338 = vmatpush.bf16.msra.mxu0 %v312
  %339 = vmatpush.bf16.msra.mxu0 %v311
  %340 = vmatmul.bf16.gmra.mxu0 %v321
  %v341 = vpop.f32.mrf.mxu0
  %v342 = vadd.f32 %v293, %v341
  %v343 = vpop.f32.mrf.mxu0
  %v344 = vadd.f32 %v293, %v343
  %345 = vmatmul.bf16.gmra.mxu0 %v324
  %v346 = vpop.f32.mrf.mxu0
  %v347 = vadd.f32 %v293, %v346
  %v348 = vpop.f32.mrf.mxu0
  %v349 = vadd.f32 %v293, %v348
  %350 = vmatmul.bf16.gmra.mxu0 %v327
  %v351 = vpop.f32.mrf.mxu0
  %v352 = vadd.f32 %v293, %v351
  %v353 = vpop.f32.mrf.mxu0
  %v354 = vadd.f32 %v293, %v353
  %355 = vmatmul.bf16.gmra.mxu0 %v330
  %v356 = vpop.f32.mrf.mxu0
  %v357 = vadd.f32 %v293, %v356
  %v358 = vpop.f32.mrf.mxu0
  %v359 = vadd.f32 %v293, %v358
  %360 = vdwg.mxu0
  %v361 = vmax.f32 %v342, 0.0
  %v362 = vmax.f32 %v344, 0.0
  %v363 = vmax.f32 %v347, 0.0
  %v364 = vmax.f32 %v349, 0.0
  %v365 = vmax.f32 %v352, 0.0
  %v366 = vmax.f32 %v354, 0.0
  %v367 = vmax.f32 %v357, 0.0
  %v368 = vmax.f32 %v359, 0.0
  %v369 = vpack.c.bf16 %v362, %v361
  %v370 = vpack.c.bf16 %v364, %v363
  %v371 = vpack.c.bf16 %v366, %v365
  %v372 = vpack.c.bf16 %v368, %v367
  %v373 = vld [vmem:[%s8] sm:$0xf]
  %v374 = vld [vmem:[%s8 + $0x4] sm:$0xf]
  %v375 = vld [vmem:[%s8 + $0x8] sm:$0xf]
  %v376 = vld [vmem:[%s8 + $0xc] sm:$0xf]
  %v377 = vld [vmem:[%s8 + $0x10] sm:$0xf]
  %v378 = vld [vmem:[%s8 + $0x14] sm:$0xf]
  %v379 = vld [vmem:[%s8 + $0x18] sm:$0xf]
  %v380 = vld [vmem:[%s8 + $0x1c] sm:$0xf]
  %v381 = vld [vmem:[%s9] sm:$0x1]
  %v383 = vperm.slane %v381, 0
  %v393 = vunpack.c.l.b16 %v373
  %v394 = vunpack.c.l.b16 %v374
  %v395 = vunpack.c.l.b16 %v375
  %v396 = vunpack.c.l.b16 %v376
  %v397 = vunpack.c.l.b16 %v377
  %v398 = vunpack.c.l.b16 %v378
  %v399 = vunpack.c.l.b16 %v379
  %v400 = vunpack.c.l.b16 %v380
  %v401 = vpack.c.b16 %v394, %v393
  %v402 = vpack.c.b16 %v396, %v395
  %v403 = vpack.c.b16 %v398, %v397
  %v404 = vpack.c.b16 %v400, %v399
  %v410 = vsel %vm319, %v369, 0
  %v413 = vsel %vm319, %v370, 0
  %v416 = vsel %vm319, %v371, 0
  %v419 = vsel %vm319, %v372, 0
  %421 = vmatpush.bf16.msra.mxu0 0
  %422 = vmatpush.bf16.msra.mxu0 0
  %423 = vmatpush.bf16.msra.mxu0 0
  %424 = vmatpush.bf16.msra.mxu0 0
  %425 = vmatpush.bf16.msra.mxu0 %v404
  %426 = vmatpush.bf16.msra.mxu0 %v403
  %427 = vmatpush.bf16.msra.mxu0 %v402
  %428 = vmatpush.bf16.msra.mxu0 %v401
  %429 = vmatmul.bf16.gmra.mxu0 %v410
  %v430 = vpop.f32.mrf.mxu0
  %v431 = vadd.f32 %v383, %v430
  %v432 = vpop.f32.mrf.mxu0
  %v433 = vadd.f32 %v383, %v432
  %434 = vmatmul.bf16.gmra.mxu0 %v413
  %v435 = vpop.f32.mrf.mxu0
  %v436 = vadd.f32 %v383, %v435
  %v437 = vpop.f32.mrf.mxu0
  %v438 = vadd.f32 %v383, %v437
  %439 = vmatmul.bf16.gmra.mxu0 %v416
  %v440 = vpop.f32.mrf.mxu0
  %v441 = vadd.f32 %v383, %v440
  %v442 = vpop.f32.mrf.mxu0
  %v443 = vadd.f32 %v383, %v442
  %444 = vmatmul.bf16.gmra.mxu0 %v419
  %v445 = vpop.f32.mrf.mxu0
  %v446 = vadd.f32 %v383, %v445
  %v447 = vpop.f32.mrf.mxu0
  %v448 = vadd.f32 %v383, %v447
  %449 = vdwg.mxu0
  %v450 = vxor.u32 %v431, 2147483648
  %v451 = vxor.u32 %v433, 2147483648
  %v452 = vxor.u32 %v436, 2147483648
  %v453 = vxor.u32 %v438, 2147483648
  %v454 = vxor.u32 %v441, 2147483648
  %v455 = vxor.u32 %v443, 2147483648
  %v456 = vxor.u32 %v446, 2147483648
  %v457 = vxor.u32 %v448, 2147483648
  %v458 = vmul.f32 %v450, 1.442695
  %v459 = vpow.pop %v458
  %v460 = vmul.f32 %v451, 1.442695
  %v461 = vpow.pop %v460
  %v462 = vmul.f32 %v452, 1.442695
  %v463 = vpow.pop %v462
  %v464 = vmul.f32 %v453, 1.442695
  %v465 = vpow.pop %v464
  %v466 = vmul.f32 %v454, 1.442695
  %v467 = vpow.pop %v466
  %v468 = vmul.f32 %v455, 1.442695
  %v469 = vpow.pop %v468
  %v470 = vmul.f32 %v456, 1.442695
  %v471 = vpow.pop %v470
  %v472 = vmul.f32 %v457, 1.442695
  %v473 = vpow.pop %v472
  %v474 = vadd.f32 %v459, 1.0
  %v475 = vadd.f32 %v461, 1.0
  %v476 = vadd.f32 %v463, 1.0
  %v477 = vadd.f32 %v465, 1.0
  %v478 = vadd.f32 %v467, 1.0
  %v479 = vadd.f32 %v469, 1.0
  %v480 = vadd.f32 %v471, 1.0
  %v481 = vadd.f32 %v473, 1.0
  %v482 = vrcp.pop %v474
  %v483 = vmul.f32 %v474, %v482
  %v484 = vsub.f32 1.0, %v483
  %v485 = vmul.f32 %v482, %v484
  %v486 = vadd.f32 %v482, %v485
  %vm487 = vweird.f32 %v474
  %vm488 = vweird.f32 %v482
  %vm489 = vmor %vm487, %vm488
  %v490 = vsel %vm489, %v482, %v486
  %v491 = vand.u32 2147483647, %v474
  %vm492 = vcmp.eq.f32.partialorder %v491, 8.507059e+37
  %v493 = vand.u32 %v474, 2147483648
  %v494 = vor.u32 1.1754944e-38, %v493
  %v495 = vsel %vm492, %v494, %v490
  %v496 = vmul.f32 1.0, %v495
  %v497 = vrcp.pop %v475
  %v498 = vmul.f32 %v475, %v497
  %v499 = vsub.f32 1.0, %v498
  %v500 = vmul.f32 %v497, %v499
  %v501 = vadd.f32 %v497, %v500
  %vm502 = vweird.f32 %v475
  %vm503 = vweird.f32 %v497
  %vm504 = vmor %vm502, %vm503
  %v505 = vsel %vm504, %v497, %v501
  %v506 = vand.u32 2147483647, %v475
  %vm507 = vcmp.eq.f32.partialorder %v506, 8.507059e+37
  %v508 = vand.u32 %v475, 2147483648
  %v509 = vor.u32 1.1754944e-38, %v508
  %v510 = vsel %vm507, %v509, %v505
  %v511 = vmul.f32 1.0, %v510
  %v512 = vrcp.pop %v476
  %v513 = vmul.f32 %v476, %v512
  %v514 = vsub.f32 1.0, %v513
  %v515 = vmul.f32 %v512, %v514
  %v516 = vadd.f32 %v512, %v515
  %vm517 = vweird.f32 %v476
  %vm518 = vweird.f32 %v512
  %vm519 = vmor %vm517, %vm518
  %v520 = vsel %vm519, %v512, %v516
  %v521 = vand.u32 2147483647, %v476
  %vm522 = vcmp.eq.f32.partialorder %v521, 8.507059e+37
  %v523 = vand.u32 %v476, 2147483648
  %v524 = vor.u32 1.1754944e-38, %v523
  %v525 = vsel %vm522, %v524, %v520
  %v526 = vmul.f32 1.0, %v525
  %v527 = vrcp.pop %v477
  %v528 = vmul.f32 %v477, %v527
  %v529 = vsub.f32 1.0, %v528
  %v530 = vmul.f32 %v527, %v529
  %v531 = vadd.f32 %v527, %v530
  %vm532 = vweird.f32 %v477
  %vm533 = vweird.f32 %v527
  %vm534 = vmor %vm532, %vm533
  %v535 = vsel %vm534, %v527, %v531
  %v536 = vand.u32 2147483647, %v477
  %vm537 = vcmp.eq.f32.partialorder %v536, 8.507059e+37
  %v538 = vand.u32 %v477, 2147483648
  %v539 = vor.u32 1.1754944e-38, %v538
  %v540 = vsel %vm537, %v539, %v535
  %v541 = vmul.f32 1.0, %v540
  %v542 = vrcp.pop %v478
  %v543 = vmul.f32 %v478, %v542
  %v544 = vsub.f32 1.0, %v543
  %v545 = vmul.f32 %v542, %v544
  %v546 = vadd.f32 %v542, %v545
  %vm547 = vweird.f32 %v478
  %vm548 = vweird.f32 %v542
  %vm549 = vmor %vm547, %vm548
  %v550 = vsel %vm549, %v542, %v546
  %v551 = vand.u32 2147483647, %v478
  %vm552 = vcmp.eq.f32.partialorder %v551, 8.507059e+37
  %v553 = vand.u32 %v478, 2147483648
  %v554 = vor.u32 1.1754944e-38, %v553
  %v555 = vsel %vm552, %v554, %v550
  %v556 = vmul.f32 1.0, %v555
  %v557 = vrcp.pop %v479
  %v558 = vmul.f32 %v479, %v557
  %v559 = vsub.f32 1.0, %v558
  %v560 = vmul.f32 %v557, %v559
  %v561 = vadd.f32 %v557, %v560
  %vm562 = vweird.f32 %v479
  %vm563 = vweird.f32 %v557
  %vm564 = vmor %vm562, %vm563
  %v565 = vsel %vm564, %v557, %v561
  %v566 = vand.u32 2147483647, %v479
  %vm567 = vcmp.eq.f32.partialorder %v566, 8.507059e+37
  %v568 = vand.u32 %v479, 2147483648
  %v569 = vor.u32 1.1754944e-38, %v568
  %v570 = vsel %vm567, %v569, %v565
  %v571 = vmul.f32 1.0, %v570
  %v572 = vrcp.pop %v480
  %v573 = vmul.f32 %v480, %v572
  %v574 = vsub.f32 1.0, %v573
  %v575 = vmul.f32 %v572, %v574
  %v576 = vadd.f32 %v572, %v575
  %vm577 = vweird.f32 %v480
  %vm578 = vweird.f32 %v572
  %vm579 = vmor %vm577, %vm578
  %v580 = vsel %vm579, %v572, %v576
  %v581 = vand.u32 2147483647, %v480
  %vm582 = vcmp.eq.f32.partialorder %v581, 8.507059e+37
  %v583 = vand.u32 %v480, 2147483648
  %v584 = vor.u32 1.1754944e-38, %v583
  %v585 = vsel %vm582, %v584, %v580
  %v586 = vmul.f32 1.0, %v585
  %v587 = vrcp.pop %v481
  %v588 = vmul.f32 %v481, %v587
  %v589 = vsub.f32 1.0, %v588
  %v590 = vmul.f32 %v587, %v589
  %v591 = vadd.f32 %v587, %v590
  %vm592 = vweird.f32 %v481
  %vm593 = vweird.f32 %v587
  %vm594 = vmor %vm592, %vm593
  %v595 = vsel %vm594, %v587, %v591
  %v596 = vand.u32 2147483647, %v481
  %vm597 = vcmp.eq.f32.partialorder %v596, 8.507059e+37
  %v598 = vand.u32 %v481, 2147483648
  %v599 = vor.u32 1.1754944e-38, %v598
  %v600 = vsel %vm597, %v599, %v595
  %v601 = vmul.f32 1.0, %v600
  %602 = vst.msk [vmem:[%s10] sm:$0xff] %vm164, %v496
  %603 = vst.msk [vmem:[%s10 + $0x8] sm:$0xff] %vm164, %v511
  %604 = vst.msk [vmem:[%s10 + $0x10] sm:$0xff] %vm164, %v526
  %605 = vst.msk [vmem:[%s10 + $0x18] sm:$0xff] %vm164, %v541
  %606 = vst.msk [vmem:[%s10 + $0x20] sm:$0xff] %vm164, %v556
  %607 = vst.msk [vmem:[%s10 + $0x28] sm:$0xff] %vm164, %v571
  %608 = vst.msk [vmem:[%s10 + $0x30] sm:$0xff] %vm164, %v586
  %609 = vst.msk [vmem:[%s10 + $0x38] sm:$0xff] %vm164, %v601
  // Predicated region
  $region42: #{radiance_net_forward.1} parent=0 // pred_check
    _
  $region43: #{radiance_net_forward.1} parent=0 // pred_check_branch
    %611 = sbr.rel (0) target = $region45
  $region44: #{radiance_net_forward.1} parent=0 // pred_region
    _
  $region45: #{radiance_net_forward.1} parent=0 // pred_fallthru
    _
  // Predicated region
  $region46: #{radiance_net_forward.1} parent=0 // pred_check
    _
  $region47: #{radiance_net_forward.1} parent=0 // pred_check_branch
    %613 = sbr.rel (0) target = $region49
  $region48: #{radiance_net_forward.1} parent=0 // pred_region
    _
  $region49: #{radiance_net_forward.1} parent=0 // pred_fallthru
    _

</llo_original>
